<compile_context>
chip_gen: v7x
topology: tpu7x:2x2x1
jax: 0.10.0
libtpu: 0.0.40
codegen_flags: <defaults>
</compile_context>

<pallas_src>
import jax
import jax.numpy as jnp
from jax.experimental import pallas as pl
from jax.experimental.pallas import tpu as pltpu


def _pick_tile(n, target, granule=128):
    """Largest multiple of `granule` that divides n and is <= target (else n)."""
    if n <= target:
        return n
    t = (min(target, n) // granule) * granule
    while t >= granule:
        if n % t == 0:
            return t
        t -= granule
    return n  # fall back to full dim (always a legal block shape)


# ---------------------------------------------------------------------------
# Kernel 1: hoisted projection — xs = x @ W_s, xt = x @ W_t   (bf16 outputs)
# grid = (N // TP,), each step handles one row block of x.
# ---------------------------------------------------------------------------
def digae_project_kernel(x_ref, ws_ref, wt_ref, xs_ref, xt_ref):
    x = x_ref[...]
    xs_ref[...] = jnp.dot(x, ws_ref[...],
                          preferred_element_type=jnp.float32).astype(xs_ref.dtype)
    xt_ref[...] = jnp.dot(x, wt_ref[...],
                          preferred_element_type=jnp.float32).astype(xt_ref.dtype)


# ---------------------------------------------------------------------------
# Kernel 2: directed propagation, single pass over A.
# grid = (N // TK, N // TI)  with k (target/column blocks) outer,
#                                 i (source/row blocks) inner.
# Per step (k, i) with A tile A[i,k] of shape (TI, TK):
#   s[i-block]     += A[i,k] @ xs[k-block]          (f32, full-resident output)
#   t^T[:, k-block] += xt^T[:, i-block] @ A[i,k]    (f32, resident across inner i)
# ---------------------------------------------------------------------------
def digae_propagate_kernel(xs_ref, xtT_ref, a_ref, s_ref, tT_ref):
    k = pl.program_id(0)
    i = pl.program_id(1)
    a = a_ref[...]                       # (TI, TK) bf16

    @pl.when(jnp.logical_and(k == 0, i == 0))
    def _():
        s_ref[...] = jnp.zeros_like(s_ref)

    @pl.when(i == 0)
    def _():
        tT_ref[...] = jnp.zeros_like(tT_ref)

    # Target propagation: t^T[:, k-block] += xt[i-block]^T @ A[i,k]
    tT_ref[...] += jnp.dot(xtT_ref[...], a, preferred_element_type=jnp.float32)

    # Source propagation: s[i-block] += A[i,k] @ xs[k-block]
    ti = a.shape[0]
    row = pl.multiple_of(i * ti, ti)
    s_ref[pl.ds(row, ti), :] += jnp.dot(a, xs_ref[...],
                                        preferred_element_type=jnp.float32)


# ---------------------------------------------------------------------------
# Kernel 3: decoder — one (TM, TN) tile of sigmoid(s @ t^T) = sigmoid(s @ tT).
# ---------------------------------------------------------------------------
def digae_decoder_kernel(s_ref, tT_ref, adj_ref):
    logits = jnp.dot(s_ref[...].astype(jnp.bfloat16),
                     tT_ref[...].astype(jnp.bfloat16),
                     preferred_element_type=jnp.float32)
    adj_ref[...] = jax.nn.sigmoid(logits)


# ---------------------------------------------------------------------------
# Wrapper
# ---------------------------------------------------------------------------
def directed_gae_forward(x, a_norm, w_s, w_t, *,
                         enc_ti=512, enc_tk=512,
                         dec_tm=256, dec_tn=2048, proj_tm=512):
    N, F = x.shape
    H = w_s.shape[1]
    assert a_norm.shape == (N, N)
    assert w_s.shape == (F, H) and w_t.shape == (F, H)

    ti = _pick_tile(N, enc_ti)
    tk = _pick_tile(N, enc_tk)
    tm = _pick_tile(N, dec_tm)
    tn = _pick_tile(N, dec_tn)
    tp = _pick_tile(N, proj_tm)

    # bf16 MXU operands; all accumulation is f32 inside the kernels.
    x_bf = x.astype(jnp.bfloat16)
    ws_bf = w_s.astype(jnp.bfloat16)
    wt_bf = w_t.astype(jnp.bfloat16)
    a_bf = a_norm.astype(jnp.bfloat16)

    # ---- hoisted projection: xs, xt = x @ W_s, x @ W_t  (bf16, [N, H]) ----
    xs, xt = pl.pallas_call(
        digae_project_kernel,
        out_shape=(jax.ShapeDtypeStruct((N, H), jnp.bfloat16),
                   jax.ShapeDtypeStruct((N, H), jnp.bfloat16)),
        grid=(N // tp,),
        in_specs=[pl.BlockSpec((tp, F), lambda i: (i, 0)),
                  pl.BlockSpec((F, H), lambda i: (0, 0)),
                  pl.BlockSpec((F, H), lambda i: (0, 0))],
        out_specs=(pl.BlockSpec((tp, H), lambda i: (i, 0)),
                   pl.BlockSpec((tp, H), lambda i: (i, 0))),
        compiler_params=pltpu.CompilerParams(dimension_semantics=("parallel",)),
    )(x_bf, ws_bf, wt_bf)

    # Tiny [N, H] transpose once (XLA) so every matmul contracts natively.
    xtT = xt.T                                            # (H, N) bf16

    # ---- propagation: s = A @ xs (f32 [N,H]),  t^T = xt^T @ A (f32 [H,N]) ----
    s, tT = pl.pallas_call(
        digae_propagate_kernel,
        out_shape=(jax.ShapeDtypeStruct((N, H), jnp.float32),
                   jax.ShapeDtypeStruct((H, N), jnp.float32)),
        grid=(N // tk, N // ti),                          # (k outer, i inner)
        in_specs=[pl.BlockSpec((tk, H), lambda k, i: (k, 0)),   # xs column-block
                  pl.BlockSpec((H, ti), lambda k, i: (0, i)),   # xt^T row-block
                  pl.BlockSpec((ti, tk), lambda k, i: (i, k))], # A tile (read once)
        out_specs=(pl.BlockSpec((N, H), lambda k, i: (0, 0)),   # s: full-resident acc
                   pl.BlockSpec((H, tk), lambda k, i: (0, k))), # t^T: resident over i
        compiler_params=pltpu.CompilerParams(
            # Both outputs accumulate across a grid axis -> neither axis may be
            # naively sharded across TensorCores (v7x megacore safety).
            dimension_semantics=("arbitrary", "arbitrary")),
    )(xs, xtT, a_bf)

    # ---- decoder: gridded sigmoid(s @ t^T), lane-dense output tiles ----
    adj_pred = pl.pallas_call(
        digae_decoder_kernel,
        out_shape=jax.ShapeDtypeStruct((N, N), jnp.float32),
        grid=(N // tm, N // tn),
        in_specs=[pl.BlockSpec((tm, H), lambda m, n: (m, 0)),
                  pl.BlockSpec((H, tn), lambda m, n: (0, n))],
        out_specs=pl.BlockSpec((tm, tn), lambda m, n: (m, n)),
        compiler_params=pltpu.CompilerParams(
            dimension_semantics=("parallel", "parallel")),
    )(s, tT)
    return adj_pred


# ---------------------------------------------------------------------------
# Plain-JAX glue: dense normalized directed adjacency from edge_index.
# A_norm = D_out^{-1/2} (A + I) D_in^{-1/2}   (DiGAE alpha = beta = 0.5)
# ---------------------------------------------------------------------------
def build_normalized_adjacency(edge_index, num_nodes):
    src, dst = edge_index[0], edge_index[1]
    a = jnp.zeros((num_nodes, num_nodes), jnp.float32)
    a = a.at[src, dst].set(1.0)               # binary adjacency (dupes collapse)
    diag = jnp.arange(num_nodes)
    a = a.at[diag, diag].set(1.0)             # self-loops without double-counting
    d_out = jnp.sum(a, axis=1)
    d_in = jnp.sum(a, axis=0)
    inv_sqrt_out = jnp.where(d_out > 0, d_out ** -0.5, 0.0)
    inv_sqrt_in = jnp.where(d_in > 0, d_in ** -0.5, 0.0)
    return inv_sqrt_out[:, None] * a * inv_sqrt_in[None, :]


if __name__ == "__main__":
    # Small deterministic problem: N nodes, F input features, H latent dims.
    N, F, H, E = 256, 64, 32, 1024

    key = jax.random.PRNGKey(0)
    kx, ke1, ke2, kws, kwt = jax.random.split(key, 5)

    x = jax.random.normal(kx, (N, F), jnp.float32)
    edge_index = jnp.stack(
        [jax.random.randint(ke1, (E,), 0, N),
         jax.random.randint(ke2, (E,), 0, N)], axis=0)            # [2, E]

    # Deterministic Glorot-ish init for the encoder's source/target weights.
    w_s = jax.random.normal(kws, (F, H), jnp.float32) * (1.0 / jnp.sqrt(F))
    w_t = jax.random.normal(kwt, (F, H), jnp.float32) * (1.0 / jnp.sqrt(F))

    a_norm = build_normalized_adjacency(edge_index, N)

    # Small tiles here so the test actually exercises multi-step grids /
    # accumulator paths; defaults are the large, perf-tuned tiles.
    adj_pred = directed_gae_forward(x, a_norm, w_s, w_t,
                                    enc_ti=128, enc_tk=128,
                                    dec_tm=128, dec_tn=128, proj_tm=128)
    adj_pred = jax.block_until_ready(adj_pred)
    assert adj_pred.shape == (N, N)

    # Mirrored-precision reference (same bf16 rounding points as the kernels).
    f32, bf = jnp.float32, jnp.bfloat16
    hi = jax.lax.Precision.HIGHEST
    mm = lambda a, b: jnp.dot(a, b, precision=hi)

    x_b = x.astype(bf).astype(f32)
    ws_b = w_s.astype(bf).astype(f32)
    wt_b = w_t.astype(bf).astype(f32)
    a_b = a_norm.astype(bf).astype(f32)
    xs_m = mm(x_b, ws_b).astype(bf).astype(f32)
    xt_m = mm(x_b, wt_b).astype(bf).astype(f32)
    s_m = mm(a_b, xs_m)                      # f32 (kernel keeps s in f32)
    t_m = mm(a_b.T, xt_m)                    # f32 (kernel keeps t^T in f32)
    logits_m = mm(s_m.astype(bf).astype(f32), t_m.astype(bf).astype(f32).T)
    ref_mirror = jax.nn.sigmoid(logits_m)
    assert jnp.allclose(adj_pred, ref_mirror, atol=2e-2, rtol=0.0)

    # Loose check against the full-f32 reference (semantic fidelity).
    s_f = mm(a_norm, mm(x, w_s))
    t_f = mm(a_norm.T, mm(x, w_t))
    ref_f32 = jax.nn.sigmoid(mm(s_f, t_f.T))
    assert float(jnp.max(jnp.abs(adj_pred - ref_f32))) < 5e-2

    # TODO(synk): recon_loss / test (negative sampling, roc_auc_score) are
    # training/eval utilities, not part of forward; not implemented as kernels.
    print("KERNEL_OK")
</pallas_src>

<mosaic_0001>
module attributes {stable_mosaic.version = 11 : i64} {
  func.func @digae_project_kernel(%arg0: i32, %arg1: memref<128x64xbf16, #tpu.memory_space<vmem>>, %arg2: memref<64x32xbf16, #tpu.memory_space<vmem>>, %arg3: memref<64x32xbf16, #tpu.memory_space<vmem>>, %arg4: memref<128x32xbf16, #tpu.memory_space<vmem>>, %arg5: memref<128x32xbf16, #tpu.memory_space<vmem>>) attributes {dimension_semantics = [#tpu.dimension_semantics<parallel>], iteration_bounds = array<i64: 2>, scalar_prefetch = 0 : i64, scratch_operands = 0 : i64, tpu.core_type = #tpu.core_type<tc>, window_params = [{transform_indices = @transform_0, window_bounds = array<i64: 128, 64>}, {pipeline_mode = #tpu.pipeline_mode<synchronous>, transform_indices = @transform_1, window_bounds = array<i64: 64, 32>}, {pipeline_mode = #tpu.pipeline_mode<synchronous>, transform_indices = @transform_2, window_bounds = array<i64: 64, 32>}, {transform_indices = @transform_3, window_bounds = array<i64: 128, 32>}, {transform_indices = @transform_4, window_bounds = array<i64: 128, 32>}]} {
    %c0 = arith.constant 0 : index
    %c0_0 = arith.constant 0 : index
    %0 = vector.load %arg1[%c0, %c0_0] : memref<128x64xbf16, #tpu.memory_space<vmem>>, vector<128x64xbf16>
    %c0_1 = arith.constant 0 : index
    %c0_2 = arith.constant 0 : index
    %1 = vector.load %arg2[%c0_1, %c0_2] : memref<64x32xbf16, #tpu.memory_space<vmem>>, vector<64x32xbf16>
    %cst = arith.constant dense<0.000000e+00> : vector<128x32xf32>
    %2 = tpu.matmul %0, %1, %cst {dimension_numbers = #tpu.dot_dimension_numbers<[1], [0], [0], [1], [0, 0, 1, 1], [], []>} : vector<128x64xbf16>, vector<64x32xbf16>, vector<128x32xf32> -> vector<128x32xf32>
    %3 = arith.truncf %2 : vector<128x32xf32> to vector<128x32xbf16>
    %c0_3 = arith.constant 0 : index
    %c0_4 = arith.constant 0 : index
    %4 = vector.load %arg4[%c0_3, %c0_4] : memref<128x32xbf16, #tpu.memory_space<vmem>>, vector<128x32xbf16>
    tpu.vector_store %arg4[%c0_3, %c0_4], %3 {strides = array<i32>} : memref<128x32xbf16, #tpu.memory_space<vmem>>, vector<128x32xbf16>,
    %c0_5 = arith.constant 0 : index
    %c0_6 = arith.constant 0 : index
    %5 = vector.load %arg3[%c0_5, %c0_6] : memref<64x32xbf16, #tpu.memory_space<vmem>>, vector<64x32xbf16>
    %cst_7 = arith.constant dense<0.000000e+00> : vector<128x32xf32>
    %6 = tpu.matmul %0, %5, %cst_7 {dimension_numbers = #tpu.dot_dimension_numbers<[1], [0], [0], [1], [0, 0, 1, 1], [], []>} : vector<128x64xbf16>, vector<64x32xbf16>, vector<128x32xf32> -> vector<128x32xf32>
    %7 = arith.truncf %6 : vector<128x32xf32> to vector<128x32xbf16>
    %c0_8 = arith.constant 0 : index
    %c0_9 = arith.constant 0 : index
    %8 = vector.load %arg5[%c0_8, %c0_9] : memref<128x32xbf16, #tpu.memory_space<vmem>>, vector<128x32xbf16>
    tpu.vector_store %arg5[%c0_8, %c0_9], %7 {strides = array<i32>} : memref<128x32xbf16, #tpu.memory_space<vmem>>, vector<128x32xbf16>,
    return
  }
  func.func @transform_0(%arg0: i32) -> (i32, i32) {
    %c0_i32 = arith.constant 0 : i32
    %c0_i32_0 = arith.constant 0 : i32
    return %arg0, %c0_i32 : i32, i32
  }
  func.func @transform_1(%arg0: i32) -> (i32, i32) {
    %c0_i32 = arith.constant 0 : i32
    %c0_i32_0 = arith.constant 0 : i32
    %c0_i32_1 = arith.constant 0 : i32
    return %c0_i32, %c0_i32_0 : i32, i32
  }
  func.func @transform_2(%arg0: i32) -> (i32, i32) {
    %c0_i32 = arith.constant 0 : i32
    %c0_i32_0 = arith.constant 0 : i32
    %c0_i32_1 = arith.constant 0 : i32
    return %c0_i32, %c0_i32_0 : i32, i32
  }
  func.func @transform_3(%arg0: i32) -> (i32, i32) {
    %c0_i32 = arith.constant 0 : i32
    %c0_i32_0 = arith.constant 0 : i32
    return %arg0, %c0_i32 : i32, i32
  }
  func.func @transform_4(%arg0: i32) -> (i32, i32) {
    %c0_i32 = arith.constant 0 : i32
    %c0_i32_0 = arith.constant 0 : i32
    return %arg0, %c0_i32 : i32, i32
  }
}

</mosaic_0001>

<llo_original>
// kernel: tpu_custom_call.1
$region0: #{tpu_custom_call.1}
  #allocation0 [shape = 'u32[]', space=smem, size = 0x4, offset = 0x4, fixed_abs, tag = 'smem constant byte address 0x4 - core index']
  #allocation1 [shape = 'u32[144,128]{1,0:T(1,128)}', space=vmem, size = 0x12000, scoped, tag = 'internal scratch']
  %s0 = inlined_call_operand.vmem [shape: bf16[256,64], index: 0, kind: input, shape index: {}]
  %s1 = inlined_call_operand.vmem [shape: bf16[64,32], index: 1, kind: input, shape index: {}]
  %s2 = inlined_call_operand.vmem [shape: bf16[64,32], index: 2, kind: input, shape index: {}]
  %s3 = inlined_call_operand.vmem [shape: bf16[256,32], index: 3, kind: output, shape index: {0}]
  %s4 = inlined_call_operand.vmem [shape: bf16[256,32], index: 4, kind: output, shape index: {1}]
  %5 = xla_tuple %s3, %s4
  %s6 = sld [smem:[#allocation0]]
  $region53: #{tpu_custom_call.1} parent=0
    _
  %s8 = ssub.s32 1, %s6
  %s9 = scalar_select 0, %s8, %s6
  loop: start=0, step=1, limit=4
  $region2: #{tpu_custom_call.1} parent=0 // loop_pre_header
    _
  $region3: #{tpu_custom_call.1} parent=0 // loop_header
    %s11 = sphi 0, %s15
    %p12 = scmp.ge.s32.totalorder %s11, 4
    %s21 = sphi 0, %s23
    %s24 = sphi 0, %s21
    %s25 = sphi 0, %s24
    %s41 = sphi 0, %s25
    %s45 = sphi 0, %s45
    %s47 = sphi 0, %s45
    %s48 = sphi 0, %s47
    %s62 = sphi 0, %s48
    %s66 = sphi 0, %s66
    %s68 = sphi 0, %s66
    %s69 = sphi 0, %s68
    %s83 = sphi 0, %s69
    %s89 = sphi 0, %s91
    %s92 = sphi 0, %s89
    %s93 = sphi 0, %s92
    %s109 = sphi 0, %s93
    %s115 = sphi 0, %s117
    %s118 = sphi 0, %s115
    %s119 = sphi 0, %s118
    %s135 = sphi 0, %s119
  $region4: #{tpu_custom_call.1} parent=0 // loop_header_branch
    %14 = sbr.rel (%p12) target = $region8
  $region5: #{tpu_custom_call.1} parent=0 // loop_body
    %s16 = ssub.s32 %s11, 1
    %s17 = ssub.s32 %s11, 2
    %s18 = sadd.s32 %s11, 1
    %s19 = ssub.s32 %s11, %s18
    %p20 = scmp.eq.s32.totalorder %s19, 0
    %s22 = sadd.s32 %s21, 1
    %s23 = scalar_select %p20, %s21, %s22
    %p26 = pneg %p20
    %p27 = scmp.eq.s32.totalorder %s11, 1
    %p28 = por %p26, %p27
    %p29 = scmp.ne.s32.totalorder %s21, %s24
    %p30 = scmp.eq.s32.totalorder %s11, 0
    %p31 = por %p29, %p30
    %p32 = scmp.ne.s32.totalorder %s21, %s24
    %p33 = scmp.eq.s32.totalorder %s16, 1
    %p34 = por %p32, %p33
    %p35 = scmp.ne.s32.totalorder %s24, %s25
    %p36 = scmp.eq.s32.totalorder %s16, 0
    %p37 = por %p35, %p36
    %p38 = scmp.ne.s32.totalorder %s24, %s25
    %p39 = scmp.eq.s32.totalorder %s17, 1
    %p40 = por %p38, %p39
    %p42 = scmp.ne.s32.totalorder %s25, %s41
    %p43 = scmp.eq.s32.totalorder %s17, 0
    %p44 = por %p42, %p43
    %s46 = sadd.s32 %s45, 1
    %p49 = scmp.eq.s32.totalorder %s11, 1
    %p50 = scmp.ne.s32.totalorder %s45, %s47
    %p51 = scmp.eq.s32.totalorder %s11, 0
    %p52 = por %p50, %p51
    %p53 = scmp.ne.s32.totalorder %s45, %s47
    %p54 = scmp.eq.s32.totalorder %s16, 1
    %p55 = por %p53, %p54
    %p56 = scmp.ne.s32.totalorder %s47, %s48
    %p57 = scmp.eq.s32.totalorder %s16, 0
    %p58 = por %p56, %p57
    %p59 = scmp.ne.s32.totalorder %s47, %s48
    %p60 = scmp.eq.s32.totalorder %s17, 1
    %p61 = por %p59, %p60
    %p63 = scmp.ne.s32.totalorder %s48, %s62
    %p64 = scmp.eq.s32.totalorder %s17, 0
    %p65 = por %p63, %p64
    %s67 = sadd.s32 %s66, 1
    %p70 = scmp.eq.s32.totalorder %s11, 1
    %p71 = scmp.ne.s32.totalorder %s66, %s68
    %p72 = scmp.eq.s32.totalorder %s11, 0
    %p73 = por %p71, %p72
    %p74 = scmp.ne.s32.totalorder %s66, %s68
    %p75 = scmp.eq.s32.totalorder %s16, 1
    %p76 = por %p74, %p75
    %p77 = scmp.ne.s32.totalorder %s68, %s69
    %p78 = scmp.eq.s32.totalorder %s16, 0
    %p79 = por %p77, %p78
    %p80 = scmp.ne.s32.totalorder %s68, %s69
    %p81 = scmp.eq.s32.totalorder %s17, 1
    %p82 = por %p80, %p81
    %p84 = scmp.ne.s32.totalorder %s69, %s83
    %p85 = scmp.eq.s32.totalorder %s17, 0
    %p86 = por %p84, %p85
    %s87 = ssub.s32 %s11, %s18
    %p88 = scmp.eq.s32.totalorder %s87, 0
    %s90 = sadd.s32 %s89, 1
    %s91 = scalar_select %p88, %s89, %s90
    %p94 = pneg %p88
    %p95 = scmp.eq.s32.totalorder %s11, 1
    %p96 = por %p94, %p95
    %p97 = scmp.ne.s32.totalorder %s89, %s92
    %p98 = scmp.eq.s32.totalorder %s11, 0
    %p99 = por %p97, %p98
    %p100 = scmp.ne.s32.totalorder %s89, %s92
    %p101 = scmp.eq.s32.totalorder %s16, 1
    %p102 = por %p100, %p101
    %p103 = scmp.ne.s32.totalorder %s92, %s93
    %p104 = scmp.eq.s32.totalorder %s16, 0
    %p105 = por %p103, %p104
    %p106 = scmp.ne.s32.totalorder %s92, %s93
    %p107 = scmp.eq.s32.totalorder %s17, 1
    %p108 = por %p106, %p107
    %p110 = scmp.ne.s32.totalorder %s93, %s109
    %p111 = scmp.eq.s32.totalorder %s17, 0
    %p112 = por %p110, %p111
    %s113 = ssub.s32 %s11, %s18
    %p114 = scmp.eq.s32.totalorder %s113, 0
    %s116 = sadd.s32 %s115, 1
    %s117 = scalar_select %p114, %s115, %s116
    %p120 = pneg %p114
    %p121 = scmp.eq.s32.totalorder %s11, 1
    %p122 = por %p120, %p121
    %p123 = scmp.ne.s32.totalorder %s115, %s118
    %p124 = scmp.eq.s32.totalorder %s11, 0
    %p125 = por %p123, %p124
    %p126 = scmp.ne.s32.totalorder %s115, %s118
    %p127 = scmp.eq.s32.totalorder %s16, 1
    %p128 = por %p126, %p127
    %p129 = scmp.ne.s32.totalorder %s118, %s119
    %p130 = scmp.eq.s32.totalorder %s16, 0
    %p131 = por %p129, %p130
    %p132 = scmp.ne.s32.totalorder %s118, %s119
    %p133 = scmp.eq.s32.totalorder %s17, 1
    %p134 = por %p132, %p133
    %p136 = scmp.ne.s32.totalorder %s119, %s135
    %p137 = scmp.eq.s32.totalorder %s17, 0
    %p138 = por %p136, %p137
    %p139 = scmp.le.s32.totalorder 1, %s11
    %p140 = scmp.lt.s32.totalorder %s11, 3
    %p141 = pnand %p139, %p140
    %p142 = pneg %p141
    // Predicated region
    $region9: #{tpu_custom_call.1} parent=5 // pred_check
      _
    $region10: #{tpu_custom_call.1} parent=5 // pred_check_branch
      %144 = sbr.rel (%p141) target = $region12
    $region11: #{tpu_custom_call.1} parent=5 // pred_region
      %s145 = ssub.s32 %s11, 1
      // Predicated region
      $region13: #{tpu_custom_call.1} parent=11 // pred_check
        %p146 = pneg %p58
      $region14: #{tpu_custom_call.1} parent=11 // pred_check_branch
        %148 = sbr.rel (%p146) target = $region16
      $region15: #{tpu_custom_call.1} parent=11 // pred_region
        _
      $region16: #{tpu_custom_call.1} parent=11 // pred_fallthru
        _
      // Predicated region
      $region17: #{tpu_custom_call.1} parent=11 // pred_check
        %p149 = pneg %p79
      $region18: #{tpu_custom_call.1} parent=11 // pred_check_branch
        %151 = sbr.rel (%p149) target = $region20
      $region19: #{tpu_custom_call.1} parent=11 // pred_region
        _
      $region20: #{tpu_custom_call.1} parent=11 // pred_fallthru
        _
    $region12: #{tpu_custom_call.1} parent=5 // pred_fallthru
      _
    %p152 = scmp.lt.s32.totalorder %s11, 2
    // Predicated region
    $region21: #{tpu_custom_call.1} parent=5 // pred_check
      %p153 = pneg %p152
    $region22: #{tpu_custom_call.1} parent=5 // pred_check_branch
      %155 = sbr.rel (%p153) target = $region24
    $region23: #{tpu_custom_call.1} parent=5 // pred_region
      // Predicated region
      $region25: #{tpu_custom_call.1} parent=23 // pred_check
        %p156 = pneg %p31
      $region26: #{tpu_custom_call.1} parent=23 // pred_check_branch
        %158 = sbr.rel (%p156) target = $region28
      $region27: #{tpu_custom_call.1} parent=23 // pred_region
        %s159 = smul.u32 16, %s11
        %p160 = scmp.lt.s32.totalorder %s159, 31
        %s161 = scalar_select %p160, %s159, 31
        %s162 = smul.addr %s161, 4
        %s163 = scalar_lea.vmem %s0, %s162
        %s164 = smul.u32 16, %s11
      $region28: #{tpu_custom_call.1} parent=23 // pred_fallthru
        _
    $region24: #{tpu_custom_call.1} parent=5 // pred_fallthru
      _
    %p165 = scmp.le.s32.totalorder 1, %s11
    %p166 = scmp.lt.s32.totalorder %s11, 3
    %p167 = pnand %p165, %p166
    %p168 = pneg %p167
    // Predicated region
    $region29: #{tpu_custom_call.1} parent=5 // pred_check
      _
    $region30: #{tpu_custom_call.1} parent=5 // pred_check_branch
      %170 = sbr.rel (%p167) target = $region32
    $region31: #{tpu_custom_call.1} parent=5 // pred_region
      %s171 = ssub.s32 %s11, 1
      %s172 = smul.u32 16, %s16
      %p173 = scmp.lt.s32.totalorder %s172, 31
      %s174 = scalar_select %p173, %s172, 31
      %s175 = smul.addr %s174, 4
      %s176 = scalar_lea.vmem %s0, %s175
      %p177 = pneg %p37
      %p178 = pneg %p34
      %p179 = pneg %p58
      %p180 = pneg %p55
      %p181 = pneg %p79
      %p182 = pneg %p76
      %p183 = pneg %p105
      %p184 = pneg %p102
      %s185 = smul.u32 16, %s16
      %p186 = scmp.lt.s32.totalorder %s185, 31
      %s187 = scalar_select %p186, %s185, 31
      %s188 = smul.addr %s187, 4
      %s189 = scalar_lea.vmem %s3, %s188
      %p190 = pneg %p131
      %p191 = pneg %p128
      %s192 = smul.u32 16, %s16
      %p193 = scmp.lt.s32.totalorder %s192, 31
      %s194 = scalar_select %p193, %s192, 31
      %s195 = smul.addr %s194, 4
      %s196 = scalar_lea.vmem %s4, %s195
      %s197 = smul.u32 16, %s16
      %p198 = scmp.lt.s32.totalorder %s197, 31
      %s199 = scalar_select %p198, %s197, 31
      %s200 = smul.addr %s199, 4
      %s201 = scalar_lea.vmem %s0, %s200
      %s202 = smul.u32 16, %s16
      %s203 = smul.u32 16, %s16
      %p204 = scmp.lt.s32.totalorder %s203, 31
      %s205 = scalar_select %p204, %s203, 31
      %s206 = smul.addr %s205, 4
      %s207 = scalar_lea.vmem %s3, %s206
      %s208 = smul.u32 16, %s16
      %s209 = smul.u32 16, %s16
      %p210 = scmp.lt.s32.totalorder %s209, 31
      %s211 = scalar_select %p210, %s209, 31
      %s212 = smul.addr %s211, 4
      %s213 = scalar_lea.vmem %s4, %s212
      %s214 = smul.u32 16, %s16
      %v216 = vld [vmem:[%s201] sm:$0xf]
      %v217 = vld [vmem:[%s201 + $0x4] sm:$0xf]
      %v218 = vld [vmem:[%s201 + $0x8] sm:$0xf]
      %v219 = vld [vmem:[%s201 + $0xc] sm:$0xf]
      %v220 = vld [vmem:[%s201 + $0x10] sm:$0xf]
      %v221 = vld [vmem:[%s201 + $0x14] sm:$0xf]
      %v222 = vld [vmem:[%s201 + $0x18] sm:$0xf]
      %v223 = vld [vmem:[%s201 + $0x1c] sm:$0xf]
      %v224 = vld [vmem:[%s201 + $0x20] sm:$0xf]
      %v225 = vld [vmem:[%s201 + $0x24] sm:$0xf]
      %v226 = vld [vmem:[%s201 + $0x28] sm:$0xf]
      %v227 = vld [vmem:[%s201 + $0x2c] sm:$0xf]
      %v228 = vld [vmem:[%s201 + $0x30] sm:$0xf]
      %v229 = vld [vmem:[%s201 + $0x34] sm:$0xf]
      %v230 = vld [vmem:[%s201 + $0x38] sm:$0xf]
      %v231 = vld [vmem:[%s201 + $0x3c] sm:$0xf]
      %v232 = vld [vmem:[%s1] sm:$0xf]
      %v233 = vld [vmem:[%s1 + $0x4] sm:$0xf]
      %v234 = vld [vmem:[%s1 + $0x8] sm:$0xf]
      %v235 = vld [vmem:[%s1 + $0xc] sm:$0xf]
      %v236 = vld [vmem:[%s1 + $0x10] sm:$0xf]
      %v237 = vld [vmem:[%s1 + $0x14] sm:$0xf]
      %v238 = vld [vmem:[%s1 + $0x18] sm:$0xf]
      %v239 = vld [vmem:[%s1 + $0x1c] sm:$0xf]
      %v256 = vunpack.c.l.b16 %v216
      %v257 = vunpack.c.l.b16 %v217
      %v258 = vunpack.c.l.b16 %v218
      %v259 = vunpack.c.l.b16 %v219
      %v260 = vunpack.c.l.b16 %v220
      %v261 = vunpack.c.l.b16 %v221
      %v262 = vunpack.c.l.b16 %v222
      %v263 = vunpack.c.l.b16 %v223
      %v264 = vunpack.c.l.b16 %v224
      %v265 = vunpack.c.l.b16 %v225
      %v266 = vunpack.c.l.b16 %v226
      %v267 = vunpack.c.l.b16 %v227
      %v268 = vunpack.c.l.b16 %v228
      %v269 = vunpack.c.l.b16 %v229
      %v270 = vunpack.c.l.b16 %v230
      %v271 = vunpack.c.l.b16 %v231
      %v272 = vpack.c.b16 %v257, %v256
      %v273 = vpack.c.b16 %v259, %v258
      %v274 = vpack.c.b16 %v261, %v260
      %v275 = vpack.c.b16 %v263, %v262
      %v276 = vpack.c.b16 %v265, %v264
      %v277 = vpack.c.b16 %v267, %v266
      %v278 = vpack.c.b16 %v269, %v268
      %v279 = vpack.c.b16 %v271, %v270
      %v288 = vunpack.c.l.b16 %v232
      %v289 = vunpack.c.l.b16 %v233
      %v290 = vunpack.c.l.b16 %v234
      %v291 = vunpack.c.l.b16 %v235
      %v292 = vunpack.c.l.b16 %v236
      %v293 = vunpack.c.l.b16 %v237
      %v294 = vunpack.c.l.b16 %v238
      %v295 = vunpack.c.l.b16 %v239
      %v296 = vpack.c.b16 %v289, %v288
      %v297 = vpack.c.b16 %v291, %v290
      %v298 = vpack.c.b16 %v293, %v292
      %v299 = vpack.c.b16 %v295, %v294
      %vm304 = vcmask 523264
      %v306 = vsel %vm304, %v272, 0
      %v309 = vsel %vm304, %v273, 0
      %v312 = vsel %vm304, %v274, 0
      %v315 = vsel %vm304, %v275, 0
      %v318 = vsel %vm304, %v276, 0
      %v321 = vsel %vm304, %v277, 0
      %v324 = vsel %vm304, %v278, 0
      %v327 = vsel %vm304, %v279, 0
      %329 = vmatprep.subr.bf16.mxu0 0
      %330 = vmatpush1.bf16.msra.mxu0 %v296
      %331 = vmatprep.subr.bf16.mxu0 0
      %332 = vmatpush1.bf16.msra.mxu0 %v297
      %333 = vmatprep.subr.bf16.mxu0 0
      %334 = vmatpush1.bf16.msra.mxu0 %v298
      %335 = vmatprep.subr.bf16.mxu0 0
      %336 = vmatpush1.bf16.msra.mxu0 %v299
      %337 = vmatprep.subr.bf16.mxu0 0
      %338 = vmatpush1.bf16.msra.mxu0 0
      %339 = vmatprep.subr.bf16.mxu0 0
      %340 = vmatpush1.bf16.msra.mxu0 0
      %341 = vmatprep.subr.bf16.mxu0 0
      %342 = vmatpush1.bf16.msra.mxu0 0
      %343 = vmatprep.subr.bf16.mxu0 0
      %344 = vmatpush1.bf16.msra.mxu0 0
      %345 = vmatprep.subr.bf16.mxu0 0
      %346 = vmatpush1.bf16.msra.mxu0 0
      %347 = vmatprep.subr.bf16.mxu0 0
      %348 = vmatpush1.bf16.msra.mxu0 0
      %349 = vmatprep.subr.bf16.mxu0 0
      %350 = vmatpush1.bf16.msra.mxu0 0
      %351 = vmatprep.subr.bf16.mxu0 0
      %352 = vmatpush1.bf16.msra.mxu0 0
      %353 = vmatprep.subr.bf16.mxu0 0
      %354 = vmatpush1.bf16.msra.mxu0 0
      %355 = vmatprep.subr.bf16.mxu0 0
      %356 = vmatpush1.bf16.msra.mxu0 0
      %357 = vmatprep.subr.bf16.mxu0 0
      %358 = vmatpush1.bf16.msra.mxu0 0
      %359 = vmatprep.subr.bf16.mxu0 0
      %360 = vmatpush1.bf16.msra.mxu0 0
      %361 = vmatprep.mubr.bf16.mxu0 0
      %362 = vmatmul.mubr.bf16.gmra.mrb[0].mxu0 %v306
      %v363 = vpop.f32.mrb[0].mxu0
      %v364 = vadd.f32 0.0, %v363
      %v365 = vpop.f32.mrb[0].mxu0
      %v366 = vpop.f32.mrb[0].mxu0
      %v367 = vadd.f32 0.0, %v366
      %v368 = vpop.f32.mrb[0].mxu0
      %369 = vmatprep.mubr.bf16.mxu0 0
      %370 = vmatmul.mubr.bf16.gmra.mrb[0].mxu0 %v309
      %v371 = vpop.f32.mrb[0].mxu0
      %v372 = vadd.f32 0.0, %v371
      %v373 = vpop.f32.mrb[0].mxu0
      %v374 = vpop.f32.mrb[0].mxu0
      %v375 = vadd.f32 0.0, %v374
      %v376 = vpop.f32.mrb[0].mxu0
      %377 = vmatprep.mubr.bf16.mxu0 0
      %378 = vmatmul.mubr.bf16.gmra.mrb[0].mxu0 %v312
      %v379 = vpop.f32.mrb[0].mxu0
      %v380 = vadd.f32 0.0, %v379
      %v381 = vpop.f32.mrb[0].mxu0
      %v382 = vpop.f32.mrb[0].mxu0
      %v383 = vadd.f32 0.0, %v382
      %v384 = vpop.f32.mrb[0].mxu0
      %385 = vmatprep.mubr.bf16.mxu0 0
      %386 = vmatmul.mubr.bf16.gmra.mrb[0].mxu0 %v315
      %v387 = vpop.f32.mrb[0].mxu0
      %v388 = vadd.f32 0.0, %v387
      %v389 = vpop.f32.mrb[0].mxu0
      %v390 = vpop.f32.mrb[0].mxu0
      %v391 = vadd.f32 0.0, %v390
      %v392 = vpop.f32.mrb[0].mxu0
      %393 = vmatprep.mubr.bf16.mxu0 0
      %394 = vmatmul.mubr.bf16.gmra.mrb[0].mxu0 %v318
      %v395 = vpop.f32.mrb[0].mxu0
      %v396 = vadd.f32 0.0, %v395
      %v397 = vpop.f32.mrb[0].mxu0
      %v398 = vpop.f32.mrb[0].mxu0
      %v399 = vadd.f32 0.0, %v398
      %v400 = vpop.f32.mrb[0].mxu0
      %401 = vmatprep.mubr.bf16.mxu0 0
      %402 = vmatmul.mubr.bf16.gmra.mrb[0].mxu0 %v321
      %v403 = vpop.f32.mrb[0].mxu0
      %v404 = vadd.f32 0.0, %v403
      %v405 = vpop.f32.mrb[0].mxu0
      %v406 = vpop.f32.mrb[0].mxu0
      %v407 = vadd.f32 0.0, %v406
      %v408 = vpop.f32.mrb[0].mxu0
      %409 = vmatprep.mubr.bf16.mxu0 0
      %410 = vmatmul.mubr.bf16.gmra.mrb[0].mxu0 %v324
      %v411 = vpop.f32.mrb[0].mxu0
      %v412 = vadd.f32 0.0, %v411
      %v413 = vpop.f32.mrb[0].mxu0
      %v414 = vpop.f32.mrb[0].mxu0
      %v415 = vadd.f32 0.0, %v414
      %v416 = vpop.f32.mrb[0].mxu0
      %417 = vmatprep.mubr.bf16.mxu0 0
      %418 = vmatmul.mubr.bf16.gmra.mrb[0].mxu0 %v327
      %v419 = vpop.f32.mrb[0].mxu0
      %v420 = vadd.f32 0.0, %v419
      %v421 = vpop.f32.mrb[0].mxu0
      %v422 = vpop.f32.mrb[0].mxu0
      %v423 = vadd.f32 0.0, %v422
      %v424 = vpop.f32.mrb[0].mxu0
      %425 = vdwg.mxu0
      %v426 = vpack.c.bf16 %v367, %v364
      %v427 = vpack.c.bf16 %v375, %v372
      %v428 = vpack.c.bf16 %v383, %v380
      %v429 = vpack.c.bf16 %v391, %v388
      %v430 = vpack.c.bf16 %v399, %v396
      %v431 = vpack.c.bf16 %v407, %v404
      %v432 = vpack.c.bf16 %v415, %v412
      %v433 = vpack.c.bf16 %v423, %v420
      %v442 = vunpack.c.l.b16 %v426
      %v443 = vunpack.c.h.b16 %v426
      %v444 = vunpack.c.l.b16 %v427
      %v445 = vunpack.c.h.b16 %v427
      %v446 = vunpack.c.l.b16 %v428
      %v447 = vunpack.c.h.b16 %v428
      %v448 = vunpack.c.l.b16 %v429
      %v449 = vunpack.c.h.b16 %v429
      %v450 = vunpack.c.l.b16 %v430
      %v451 = vunpack.c.h.b16 %v430
      %v452 = vunpack.c.l.b16 %v431
      %v453 = vunpack.c.h.b16 %v431
      %v454 = vunpack.c.l.b16 %v432
      %v455 = vunpack.c.h.b16 %v432
      %v456 = vunpack.c.l.b16 %v433
      %v457 = vunpack.c.h.b16 %v433
      %v458 = vpack.c.b16 %v442, %v442
      %v459 = vpack.c.b16 %v443, %v443
      %v460 = vpack.c.b16 %v444, %v444
      %v461 = vpack.c.b16 %v445, %v445
      %v462 = vpack.c.b16 %v446, %v446
      %v463 = vpack.c.b16 %v447, %v447
      %v464 = vpack.c.b16 %v448, %v448
      %v465 = vpack.c.b16 %v449, %v449
      %v466 = vpack.c.b16 %v450, %v450
      %v467 = vpack.c.b16 %v451, %v451
      %v468 = vpack.c.b16 %v452, %v452
      %v469 = vpack.c.b16 %v453, %v453
      %v470 = vpack.c.b16 %v454, %v454
      %v471 = vpack.c.b16 %v455, %v455
      %v472 = vpack.c.b16 %v456, %v456
      %v473 = vpack.c.b16 %v457, %v457
      %vm490 = vcmask 257024
      %491 = vst.msk [vmem:[%s207] sm:$0xf] %vm490, %v458
      %492 = vst.msk [vmem:[%s207 + $0x4] sm:$0xf] %vm490, %v459
      %493 = vst.msk [vmem:[%s207 + $0x8] sm:$0xf] %vm490, %v460
      %494 = vst.msk [vmem:[%s207 + $0xc] sm:$0xf] %vm490, %v461
      %495 = vst.msk [vmem:[%s207 + $0x10] sm:$0xf] %vm490, %v462
      %496 = vst.msk [vmem:[%s207 + $0x14] sm:$0xf] %vm490, %v463
      %497 = vst.msk [vmem:[%s207 + $0x18] sm:$0xf] %vm490, %v464
      %498 = vst.msk [vmem:[%s207 + $0x1c] sm:$0xf] %vm490, %v465
      %499 = vst.msk [vmem:[%s207 + $0x20] sm:$0xf] %vm490, %v466
      %500 = vst.msk [vmem:[%s207 + $0x24] sm:$0xf] %vm490, %v467
      %501 = vst.msk [vmem:[%s207 + $0x28] sm:$0xf] %vm490, %v468
      %502 = vst.msk [vmem:[%s207 + $0x2c] sm:$0xf] %vm490, %v469
      %503 = vst.msk [vmem:[%s207 + $0x30] sm:$0xf] %vm490, %v470
      %504 = vst.msk [vmem:[%s207 + $0x34] sm:$0xf] %vm490, %v471
      %505 = vst.msk [vmem:[%s207 + $0x38] sm:$0xf] %vm490, %v472
      %506 = vst.msk [vmem:[%s207 + $0x3c] sm:$0xf] %vm490, %v473
      %v507 = vld [vmem:[%s2] sm:$0xf]
      %v508 = vld [vmem:[%s2 + $0x4] sm:$0xf]
      %v509 = vld [vmem:[%s2 + $0x8] sm:$0xf]
      %v510 = vld [vmem:[%s2 + $0xc] sm:$0xf]
      %v511 = vld [vmem:[%s2 + $0x10] sm:$0xf]
      %v512 = vld [vmem:[%s2 + $0x14] sm:$0xf]
      %v513 = vld [vmem:[%s2 + $0x18] sm:$0xf]
      %v514 = vld [vmem:[%s2 + $0x1c] sm:$0xf]
      %v523 = vunpack.c.l.b16 %v507
      %v524 = vunpack.c.l.b16 %v508
      %v525 = vunpack.c.l.b16 %v509
      %v526 = vunpack.c.l.b16 %v510
      %v527 = vunpack.c.l.b16 %v511
      %v528 = vunpack.c.l.b16 %v512
      %v529 = vunpack.c.l.b16 %v513
      %v530 = vunpack.c.l.b16 %v514
      %v531 = vpack.c.b16 %v524, %v523
      %v532 = vpack.c.b16 %v526, %v525
      %v533 = vpack.c.b16 %v528, %v527
      %v534 = vpack.c.b16 %v530, %v529
      %539 = vmatprep.subr.bf16.mxu0 0
      %540 = vmatpush1.bf16.msra.mxu0 %v531
      %541 = vmatprep.subr.bf16.mxu0 0
      %542 = vmatpush1.bf16.msra.mxu0 %v532
      %543 = vmatprep.subr.bf16.mxu0 0
      %544 = vmatpush1.bf16.msra.mxu0 %v533
      %545 = vmatprep.subr.bf16.mxu0 0
      %546 = vmatpush1.bf16.msra.mxu0 %v534
      %547 = vmatprep.subr.bf16.mxu0 0
      %548 = vmatpush1.bf16.msra.mxu0 0
      %549 = vmatprep.subr.bf16.mxu0 0
      %550 = vmatpush1.bf16.msra.mxu0 0
      %551 = vmatprep.subr.bf16.mxu0 0
      %552 = vmatpush1.bf16.msra.mxu0 0
      %553 = vmatprep.subr.bf16.mxu0 0
      %554 = vmatpush1.bf16.msra.mxu0 0
      %555 = vmatprep.subr.bf16.mxu0 0
      %556 = vmatpush1.bf16.msra.mxu0 0
      %557 = vmatprep.subr.bf16.mxu0 0
      %558 = vmatpush1.bf16.msra.mxu0 0
      %559 = vmatprep.subr.bf16.mxu0 0
      %560 = vmatpush1.bf16.msra.mxu0 0
      %561 = vmatprep.subr.bf16.mxu0 0
      %562 = vmatpush1.bf16.msra.mxu0 0
      %563 = vmatprep.subr.bf16.mxu0 0
      %564 = vmatpush1.bf16.msra.mxu0 0
      %565 = vmatprep.subr.bf16.mxu0 0
      %566 = vmatpush1.bf16.msra.mxu0 0
      %567 = vmatprep.subr.bf16.mxu0 0
      %568 = vmatpush1.bf16.msra.mxu0 0
      %569 = vmatprep.subr.bf16.mxu0 0
      %570 = vmatpush1.bf16.msra.mxu0 0
      %571 = vmatprep.mubr.bf16.mxu0 0
      %572 = vmatmul.mubr.bf16.gmra.mrb[0].mxu0 %v306
      %v573 = vpop.f32.mrb[0].mxu0
      %v574 = vadd.f32 0.0, %v573
      %v575 = vpop.f32.mrb[0].mxu0
      %v576 = vpop.f32.mrb[0].mxu0
      %v577 = vadd.f32 0.0, %v576
      %v578 = vpop.f32.mrb[0].mxu0
      %579 = vmatprep.mubr.bf16.mxu0 0
      %580 = vmatmul.mubr.bf16.gmra.mrb[0].mxu0 %v309
      %v581 = vpop.f32.mrb[0].mxu0
      %v582 = vadd.f32 0.0, %v581
      %v583 = vpop.f32.mrb[0].mxu0
      %v584 = vpop.f32.mrb[0].mxu0
      %v585 = vadd.f32 0.0, %v584
      %v586 = vpop.f32.mrb[0].mxu0
      %587 = vmatprep.mubr.bf16.mxu0 0
      %588 = vmatmul.mubr.bf16.gmra.mrb[0].mxu0 %v312
      %v589 = vpop.f32.mrb[0].mxu0
      %v590 = vadd.f32 0.0, %v589
      %v591 = vpop.f32.mrb[0].mxu0
      %v592 = vpop.f32.mrb[0].mxu0
      %v593 = vadd.f32 0.0, %v592
      %v594 = vpop.f32.mrb[0].mxu0
      %595 = vmatprep.mubr.bf16.mxu0 0
      %596 = vmatmul.mubr.bf16.gmra.mrb[0].mxu0 %v315
      %v597 = vpop.f32.mrb[0].mxu0
      %v598 = vadd.f32 0.0, %v597
      %v599 = vpop.f32.mrb[0].mxu0
      %v600 = vpop.f32.mrb[0].mxu0
      %v601 = vadd.f32 0.0, %v600
      %v602 = vpop.f32.mrb[0].mxu0
      %603 = vmatprep.mubr.bf16.mxu0 0
      %604 = vmatmul.mubr.bf16.gmra.mrb[0].mxu0 %v318
      %v605 = vpop.f32.mrb[0].mxu0
      %v606 = vadd.f32 0.0, %v605
      %v607 = vpop.f32.mrb[0].mxu0
      %v608 = vpop.f32.mrb[0].mxu0
      %v609 = vadd.f32 0.0, %v608
      %v610 = vpop.f32.mrb[0].mxu0
      %611 = vmatprep.mubr.bf16.mxu0 0
      %612 = vmatmul.mubr.bf16.gmra.mrb[0].mxu0 %v321
      %v613 = vpop.f32.mrb[0].mxu0
      %v614 = vadd.f32 0.0, %v613
      %v615 = vpop.f32.mrb[0].mxu0
      %v616 = vpop.f32.mrb[0].mxu0
      %v617 = vadd.f32 0.0, %v616
      %v618 = vpop.f32.mrb[0].mxu0
      %619 = vmatprep.mubr.bf16.mxu0 0
      %620 = vmatmul.mubr.bf16.gmra.mrb[0].mxu0 %v324
      %v621 = vpop.f32.mrb[0].mxu0
      %v622 = vadd.f32 0.0, %v621
      %v623 = vpop.f32.mrb[0].mxu0
      %v624 = vpop.f32.mrb[0].mxu0
      %v625 = vadd.f32 0.0, %v624
      %v626 = vpop.f32.mrb[0].mxu0
      %627 = vmatprep.mubr.bf16.mxu0 0
      %628 = vmatmul.mubr.bf16.gmra.mrb[0].mxu0 %v327
      %v629 = vpop.f32.mrb[0].mxu0
      %v630 = vadd.f32 0.0, %v629
      %v631 = vpop.f32.mrb[0].mxu0
      %v632 = vpop.f32.mrb[0].mxu0
      %v633 = vadd.f32 0.0, %v632
      %v634 = vpop.f32.mrb[0].mxu0
      %635 = vdwg.mxu0
      %v636 = vpack.c.bf16 %v577, %v574
      %v637 = vpack.c.bf16 %v585, %v582
      %v638 = vpack.c.bf16 %v593, %v590
      %v639 = vpack.c.bf16 %v601, %v598
      %v640 = vpack.c.bf16 %v609, %v606
      %v641 = vpack.c.bf16 %v617, %v614
      %v642 = vpack.c.bf16 %v625, %v622
      %v643 = vpack.c.bf16 %v633, %v630
      %v652 = vunpack.c.l.b16 %v636
      %v653 = vunpack.c.h.b16 %v636
      %v654 = vunpack.c.l.b16 %v637
      %v655 = vunpack.c.h.b16 %v637
      %v656 = vunpack.c.l.b16 %v638
      %v657 = vunpack.c.h.b16 %v638
      %v658 = vunpack.c.l.b16 %v639
      %v659 = vunpack.c.h.b16 %v639
      %v660 = vunpack.c.l.b16 %v640
      %v661 = vunpack.c.h.b16 %v640
      %v662 = vunpack.c.l.b16 %v641
      %v663 = vunpack.c.h.b16 %v641
      %v664 = vunpack.c.l.b16 %v642
      %v665 = vunpack.c.h.b16 %v642
      %v666 = vunpack.c.l.b16 %v643
      %v667 = vunpack.c.h.b16 %v643
      %v668 = vpack.c.b16 %v652, %v652
      %v669 = vpack.c.b16 %v653, %v653
      %v670 = vpack.c.b16 %v654, %v654
      %v671 = vpack.c.b16 %v655, %v655
      %v672 = vpack.c.b16 %v656, %v656
      %v673 = vpack.c.b16 %v657, %v657
      %v674 = vpack.c.b16 %v658, %v658
      %v675 = vpack.c.b16 %v659, %v659
      %v676 = vpack.c.b16 %v660, %v660
      %v677 = vpack.c.b16 %v661, %v661
      %v678 = vpack.c.b16 %v662, %v662
      %v679 = vpack.c.b16 %v663, %v663
      %v680 = vpack.c.b16 %v664, %v664
      %v681 = vpack.c.b16 %v665, %v665
      %v682 = vpack.c.b16 %v666, %v666
      %v683 = vpack.c.b16 %v667, %v667
      %700 = vst.msk [vmem:[%s213] sm:$0xf] %vm490, %v668
      %701 = vst.msk [vmem:[%s213 + $0x4] sm:$0xf] %vm490, %v669
      %702 = vst.msk [vmem:[%s213 + $0x8] sm:$0xf] %vm490, %v670
      %703 = vst.msk [vmem:[%s213 + $0xc] sm:$0xf] %vm490, %v671
      %704 = vst.msk [vmem:[%s213 + $0x10] sm:$0xf] %vm490, %v672
      %705 = vst.msk [vmem:[%s213 + $0x14] sm:$0xf] %vm490, %v673
      %706 = vst.msk [vmem:[%s213 + $0x18] sm:$0xf] %vm490, %v674
      %707 = vst.msk [vmem:[%s213 + $0x1c] sm:$0xf] %vm490, %v675
      %708 = vst.msk [vmem:[%s213 + $0x20] sm:$0xf] %vm490, %v676
      %709 = vst.msk [vmem:[%s213 + $0x24] sm:$0xf] %vm490, %v677
      %710 = vst.msk [vmem:[%s213 + $0x28] sm:$0xf] %vm490, %v678
      %711 = vst.msk [vmem:[%s213 + $0x2c] sm:$0xf] %vm490, %v679
      %712 = vst.msk [vmem:[%s213 + $0x30] sm:$0xf] %vm490, %v680
      %713 = vst.msk [vmem:[%s213 + $0x34] sm:$0xf] %vm490, %v681
      %714 = vst.msk [vmem:[%s213 + $0x38] sm:$0xf] %vm490, %v682
      %715 = vst.msk [vmem:[%s213 + $0x3c] sm:$0xf] %vm490, %v683
      %s716 = smul.u32 16, %s16
      %p717 = scmp.lt.s32.totalorder %s716, 31
      %s718 = scalar_select %p717, %s716, 31
      %s719 = smul.addr %s718, 4
      %s720 = scalar_lea.vmem %s3, %s719
      %s721 = smul.u32 16, %s16
      %p722 = scmp.lt.s32.totalorder %s721, 31
      %s723 = scalar_select %p722, %s721, 31
      %s724 = smul.addr %s723, 4
      %s725 = scalar_lea.vmem %s4, %s724
      // Predicated region
      $region33: #{tpu_custom_call.1} parent=31 // pred_check
        %p726 = pneg %p102
      $region34: #{tpu_custom_call.1} parent=31 // pred_check_branch
        %728 = sbr.rel (%p726) target = $region36
      $region35: #{tpu_custom_call.1} parent=31 // pred_region
        %s729 = smul.u32 16, %s16
      $region36: #{tpu_custom_call.1} parent=31 // pred_fallthru
        _
      // Predicated region
      $region37: #{tpu_custom_call.1} parent=31 // pred_check
        %p730 = pneg %p128
      $region38: #{tpu_custom_call.1} parent=31 // pred_check_branch
        %732 = sbr.rel (%p730) target = $region40
      $region39: #{tpu_custom_call.1} parent=31 // pred_region
        %s733 = smul.u32 16, %s16
      $region40: #{tpu_custom_call.1} parent=31 // pred_fallthru
        _
    $region32: #{tpu_custom_call.1} parent=5 // pred_fallthru
      _
    %p734 = scmp.le.s32.totalorder 2, %s11
    // Predicated region
    $region41: #{tpu_custom_call.1} parent=5 // pred_check
      %p735 = pneg %p734
    $region42: #{tpu_custom_call.1} parent=5 // pred_check_branch
      %737 = sbr.rel (%p735) target = $region44
    $region43: #{tpu_custom_call.1} parent=5 // pred_region
      %s738 = ssub.s32 %s11, 2
      // Predicated region
      $region45: #{tpu_custom_call.1} parent=43 // pred_check
        %p739 = pneg %p108
      $region46: #{tpu_custom_call.1} parent=43 // pred_check_branch
        %741 = sbr.rel (%p739) target = $region48
      $region47: #{tpu_custom_call.1} parent=43 // pred_region
        %s742 = smul.u32 16, %s17
        %p743 = scmp.lt.s32.totalorder %s742, 31
        %s744 = scalar_select %p743, %s742, 31
        %s745 = smul.addr %s744, 4
        %s746 = scalar_lea.vmem %s3, %s745
      $region48: #{tpu_custom_call.1} parent=43 // pred_fallthru
        _
      // Predicated region
      $region49: #{tpu_custom_call.1} parent=43 // pred_check
        %p747 = pneg %p134
      $region50: #{tpu_custom_call.1} parent=43 // pred_check_branch
        %749 = sbr.rel (%p747) target = $region52
      $region51: #{tpu_custom_call.1} parent=43 // pred_region
        %s750 = smul.u32 16, %s17
        %p751 = scmp.lt.s32.totalorder %s750, 31
        %s752 = scalar_select %p751, %s750, 31
        %s753 = smul.addr %s752, 4
        %s754 = scalar_lea.vmem %s4, %s753
      $region52: #{tpu_custom_call.1} parent=43 // pred_fallthru
        _
    $region44: #{tpu_custom_call.1} parent=5 // pred_fallthru
      _
  $region6: #{tpu_custom_call.1} parent=0 // loop_footer
    %s15 = sadd.s32 1, %s11
  $region7: #{tpu_custom_call.1} parent=0 // loop_footer_branch
    %10 = sbr.rel target = $region3
  $region8: #{tpu_custom_call.1} parent=0 // loop_exit
    _

</llo_original>
